<compile_context>
chip_gen: v6e
topology: v6e:2x2x1
jax: 0.10.0
libtpu: 0.0.40
codegen_flags: <defaults>
</compile_context>

<pallas_src>
import jax
import jax.numpy as jnp
from jax.experimental import pallas as pl
from jax.experimental.pallas import tpu as pltpu


def _norm_kernel(sb_ref, x_ref, o_ref):
    # sb_ref: (row_tile, 2) f32 — [:, 0] = 1/sigma, [:, 1] = -mean/sigma
    # x_ref / o_ref: (row_tile, hw) tile of the flattened (N*C, H*W) image.
    sb = sb_ref[...]
    scale = sb[:, 0:1]                      # (row_tile, 1) f32
    bias = sb[:, 1:2]                       # (row_tile, 1) f32
    x = x_ref[...].astype(jnp.float32)
    o_ref[...] = (x * scale + bias).astype(o_ref.dtype)


def _tpu_budgets():
    """Return (target_block_bytes, vmem_limit_bytes), generation-aware."""
    try:
        info = pltpu.get_tpu_info()
        vmem_cap = int(getattr(info, "vmem_capacity_bytes", 0)) or (128 << 20)
    except Exception:  # tracing off-TPU / API unavailable -> conservative default
        vmem_cap = 128 << 20
    if vmem_cap <= (64 << 20):
        # v7x: 64 MiB per TensorCore. 6 MiB blocks double-buffered for both the
        # input and output (~24 MiB) plus the tiny sb side-input fit in 40 MiB.
        return 6 << 20, 40 << 20
    # v5e / v6e: 128 MiB physical VMEM; only the default scoped limit (16/32
    # MiB) is the ceiling, so raise it and use 8 MiB blocks.
    return 8 << 20, 64 << 20


def _pick_row_tile(rows, hw, itemsize, target_block_bytes):
    # Sublane packing: 8 rows for 4-byte, 16 for 2-byte, 32 for 1-byte dtypes.
    pack = {4: 8, 2: 16, 1: 32}.get(itemsize, 8)
    if rows <= pack:
        return rows                          # block == full row dim (allowed)
    rt = (target_block_bytes // max(1, hw * itemsize)) // pack * pack
    rt = max(pack, rt)
    rt = min(rt, (rows // pack) * pack)      # never exceed the array, keep pack-aligned
    # v7x has 2 TensorCores sharding the "parallel" row axis; prefer >= 8
    # similarly sized tiles when the row count allows it so both cores stream
    # with low imbalance. Harmless on single-core v5e/v6e.
    min_tiles = 8
    if rows >= pack * min_tiles:
        cap = max(pack, (rows // min_tiles) // pack * pack)
        rt = min(rt, cap)
    return rt


def normalization(x, mean, sigma, *, target_block_bytes=None,
                  min_pallas_bytes=1 << 20):
    """(x - mean) / sigma for NCHW x, per-channel mean/sigma of shape (C,)."""
    N, C, H, W = x.shape
    rows = N * C
    hw = H * W
    itemsize = jnp.dtype(x.dtype).itemsize

    # Tiny-input fallback: a one-tile pallas_call pays fixed launch + DMA-setup
    # cost on microseconds of HBM traffic; let XLA fuse the elementwise op.
    if rows * hw * itemsize < min_pallas_bytes:
        return (x - mean[None, :, None, None]) / sigma[None, :, None, None]

    auto_block, vmem_limit = _tpu_budgets()
    if target_block_bytes is None:
        target_block_bytes = auto_block

    row_tile = _pick_row_tile(rows, hw, itemsize, target_block_bytes)
    num_tiles = pl.cdiv(rows, row_tile)
    rows_padded = num_tiles * row_tile

    x2 = x.reshape(rows, hw)

    # Fold (x - mean) / sigma into x * scale + bias; keep params in f32 for
    # accuracy regardless of x dtype (only the output is cast back).
    mean_f = mean.astype(jnp.float32)
    sigma_f = sigma.astype(jnp.float32)
    scale = 1.0 / sigma_f                                  # (C,)
    bias = -mean_f / sigma_f                               # (C,)
    sb = jnp.stack([scale, bias], axis=-1)                 # (C, 2)
    sb = jnp.broadcast_to(sb[None], (N, C, 2)).reshape(rows, 2)
    if rows_padded != rows:
        sb = jnp.pad(sb, ((0, rows_padded - rows), (0, 0)))

    out2 = pl.pallas_call(
        _norm_kernel,
        out_shape=jax.ShapeDtypeStruct((rows, hw), x.dtype),
        grid=(num_tiles,),
        in_specs=[
            # Per-tile scale/bias: ~row_tile*8 B side DMA per step, hidden
            # behind the multi-MiB x/out DMAs; no VMEM-resident padded copy.
            pl.BlockSpec((row_tile, 2), lambda i: (i, 0)),
            pl.BlockSpec((row_tile, hw), lambda i: (i, 0)),
        ],
        out_specs=pl.BlockSpec((row_tile, hw), lambda i: (i, 0)),
        compiler_params=pltpu.CompilerParams(
            dimension_semantics=("parallel",),
            vmem_limit_bytes=vmem_limit,
        ),
    )(sb, x2)

    return out2.reshape(N, C, H, W)


def _check(x, mean, sigma, *, force_pallas=True, rtol=1e-5, atol=1e-5):
    kwargs = {"min_pallas_bytes": 0} if force_pallas else {}
    out = jax.block_until_ready(normalization(x, mean, sigma, **kwargs))
    ref = (x - mean[None, :, None, None]) / sigma[None, :, None, None]
    assert out.shape == ref.shape and out.dtype == ref.dtype
    assert jnp.allclose(out, ref, rtol=rtol, atol=atol)


if __name__ == "__main__":
    key = jax.random.PRNGKey(0)
    kx, km, ks, kx2, km2, ks2 = jax.random.split(key, 6)

    # Small NCHW input consistent with an image-normalization layer.
    N, C, H, W = 2, 4, 16, 16
    x = jax.random.normal(kx, (N, C, H, W), dtype=jnp.float32)
    mean = jax.random.normal(km, (C,), dtype=jnp.float32) * 0.5
    sigma = jax.random.uniform(ks, (C,), dtype=jnp.float32, minval=0.5, maxval=1.5)
    _check(x, mean, sigma, force_pallas=True)     # exercises the Pallas kernel
    _check(x, mean, sigma, force_pallas=False)    # exercises the tiny-input fallback

    # Second small case exercising uneven rows (N*C=9), a non-128-multiple
    # spatial size (14x14) and a cdiv grid with a masked edge tile.
    N2, C2, H2, W2 = 3, 3, 14, 14
    x2 = jax.random.normal(kx2, (N2, C2, H2, W2), dtype=jnp.float32)
    mean2 = jax.random.normal(km2, (C2,), dtype=jnp.float32) * 0.5
    sigma2 = jax.random.uniform(ks2, (C2,), dtype=jnp.float32, minval=0.5, maxval=1.5)
    _check(x2, mean2, sigma2, force_pallas=True)

    print("KERNEL_OK")
</pallas_src>

<mosaic_0001>
module attributes {stable_mosaic.version = 11 : i64} {
  func.func @_norm_kernel(%arg0: i32, %arg1: memref<8x2xf32, #tpu.memory_space<vmem>>, %arg2: memref<8x256xf32, #tpu.memory_space<vmem>>, %arg3: memref<8x256xf32, #tpu.memory_space<vmem>>) attributes {dimension_semantics = [#tpu.dimension_semantics<parallel>], iteration_bounds = array<i64: 1>, scalar_prefetch = 0 : i64, scratch_operands = 0 : i64, tpu.core_type = #tpu.core_type<tc>, window_params = [{transform_indices = @transform_0, window_bounds = array<i64: 8, 2>}, {transform_indices = @transform_1, window_bounds = array<i64: 8, 256>}, {transform_indices = @transform_2, window_bounds = array<i64: 8, 256>}]} {
    %c0 = arith.constant 0 : index
    %c0_0 = arith.constant 0 : index
    %0 = vector.load %arg1[%c0, %c0_0] : memref<8x2xf32, #tpu.memory_space<vmem>>, vector<8x2xf32>
    %1 = vector.extract_strided_slice %0 {offsets = [0, 0], sizes = [8, 1], strides = [1, 1]} : vector<8x2xf32> to vector<8x1xf32>
    %2 = vector.extract_strided_slice %0 {offsets = [0, 1], sizes = [8, 1], strides = [1, 1]} : vector<8x2xf32> to vector<8x1xf32>
    %c0_1 = arith.constant 0 : index
    %c0_2 = arith.constant 0 : index
    %3 = vector.load %arg2[%c0_1, %c0_2] : memref<8x256xf32, #tpu.memory_space<vmem>>, vector<8x256xf32>
    %4 = vector.broadcast %1 : vector<8x1xf32> to vector<8x256xf32>
    %5 = arith.mulf %3, %4 : vector<8x256xf32>
    %6 = vector.broadcast %2 : vector<8x1xf32> to vector<8x256xf32>
    %7 = arith.addf %5, %6 : vector<8x256xf32>
    %c0_3 = arith.constant 0 : index
    %c0_4 = arith.constant 0 : index
    %8 = vector.load %arg3[%c0_3, %c0_4] : memref<8x256xf32, #tpu.memory_space<vmem>>, vector<8x256xf32>
    tpu.vector_store %arg3[%c0_3, %c0_4], %7 {strides = array<i32>} : memref<8x256xf32, #tpu.memory_space<vmem>>, vector<8x256xf32>,
    return
  }
  func.func @transform_0(%arg0: i32) -> (i32, i32) {
    %c0_i32 = arith.constant 0 : i32
    %c0_i32_0 = arith.constant 0 : i32
    return %arg0, %c0_i32 : i32, i32
  }
  func.func @transform_1(%arg0: i32) -> (i32, i32) {
    %c0_i32 = arith.constant 0 : i32
    %c0_i32_0 = arith.constant 0 : i32
    return %arg0, %c0_i32 : i32, i32
  }
  func.func @transform_2(%arg0: i32) -> (i32, i32) {
    %c0_i32 = arith.constant 0 : i32
    %c0_i32_0 = arith.constant 0 : i32
    return %arg0, %c0_i32 : i32, i32
  }
}

</mosaic_0001>

<llo_original>
// kernel: tpu_custom_call.1
$region0: #{tpu_custom_call.1}
  #allocation0 [shape = 'u32[]', space=smem, size = 0x4, offset = 0x4, fixed_abs, tag = 'smem constant byte address 0x4 - core index']
  #allocation1 [shape = 'u32[144,128]{1,0:T(1,128)}', space=vmem, size = 0x12000, scoped, tag = 'internal scratch']
  %s0 = inlined_call_operand.vmem [shape: f32[8,2], index: 0, kind: input, shape index: {}]
  %s1 = inlined_call_operand.hbm [shape: f32[8,256], index: 1, kind: input, shape index: {}]
  %s2 = inlined_call_operand.hbm [shape: f32[8,256], index: 2, kind: output, shape index: {}]
  %s3 = sld [smem:[#allocation0]]
  $region22: #{tpu_custom_call.1} parent=0
    _
  %s5 = ssub.s32 1, %s3
  %s6 = scalar_select 0, %s5, %s3
  $region1: #{tpu_custom_call.1} parent=0
    #allocation2 [shape = 'u8[8192]{0}', space=vmem, size = 0x2000, scoped, tag = 'input window, operand 1, single buffered']
    #allocation3 [shape = 's32[1]{0}', space=sflag, size = 0x4, scoped, tag = 'scoped memory for tpu_custom_call.1']
    #allocation4 [shape = 's32[1]{0}', space=sflag, size = 0x4, scoped, tag = 'scoped memory for tpu_custom_call.1']
    #allocation5 [shape = 'u8[8192]{0}', space=vmem, size = 0x2000, scoped, tag = 'output window, operand 0, single buffered']
    %7 = vsyncpa [#allocation3], 0
    %8 = vsyncpa [#allocation4], 0
    // Predicated region
    $region2: #{tpu_custom_call.1} parent=1 // pred_check
      _
    $region3: #{tpu_custom_call.1} parent=1 // pred_check_branch
      %10 = sbr.rel (0) target = $region5
    $region4: #{tpu_custom_call.1} parent=1 // pred_region
      _
    $region5: #{tpu_custom_call.1} parent=1 // pred_fallthru
      _
    // Predicated region
    $region6: #{tpu_custom_call.1} parent=1 // pred_check
      _
    $region7: #{tpu_custom_call.1} parent=1 // pred_check_branch
      %12 = sbr.rel (0) target = $region9
    $region8: #{tpu_custom_call.1} parent=1 // pred_region
      %s14 = ssub.s32 256, 256
      %15 = vsyncadd [#allocation3], %s14
      %s17 = sshll.u32 [#allocation2], 4
      %s18 = int_to_ptr.vmem [resolvable:$true] %s17
      %20 = dma.hbm_to_vmem [thread:$0]  %s1, 256, %s18, [#allocation3]
    $region9: #{tpu_custom_call.1} parent=1 // pred_fallthru
      _
    // Predicated region
    $region10: #{tpu_custom_call.1} parent=1 // pred_check
      _
    $region11: #{tpu_custom_call.1} parent=1 // pred_check_branch
      %22 = sbr.rel (0) target = $region13
    $region12: #{tpu_custom_call.1} parent=1 // pred_region
      %23 = dma.done [#allocation3], 256
    $region13: #{tpu_custom_call.1} parent=1 // pred_fallthru
      _
    %v24 = vld [vmem:[%s0] sm:$0xff]
    %v25 = vld [vmem:[#allocation2] sm:$0xff]
    %v26 = vld [vmem:[#allocation2 + $0x8] sm:$0xff]
    %28 = vset.pattern.permute.xlu0 0
    %29 = vperm.xlu0 %28, %v24
    %v30 = vpop.permute.xlu0 %29
    %v32 = vmul.f32 %v25, %v30
    %v33 = vmul.f32 %v26, %v30
    %34 = vset.pattern.permute.xlu0 1
    %35 = vperm.xlu0 %34, %v24
    %v36 = vpop.permute.xlu0 %35
    %v38 = vadd.f32 %v32, %v36
    %v39 = vadd.f32 %v33, %v36
    %40 = vst [vmem:[#allocation5] sm:$0xff] %v38
    %41 = vst [vmem:[#allocation5 + $0x8] sm:$0xff] %v39
    // Predicated region
    $region14: #{tpu_custom_call.1} parent=1 // pred_check
      _
    $region15: #{tpu_custom_call.1} parent=1 // pred_check_branch
      %43 = sbr.rel (0) target = $region17
    $region16: #{tpu_custom_call.1} parent=1 // pred_region
      %s45 = ssub.s32 256, 256
      %46 = vsyncadd [#allocation4], %s45
      %s48 = sshll.u32 [#allocation5], 4
      %s49 = int_to_ptr.vmem [resolvable:$true] %s48
      %51 = dma.vmem_to_hbm [thread:$0]  %s49, 256, %s2, [#allocation4]
    $region17: #{tpu_custom_call.1} parent=1 // pred_fallthru
      _
    // Predicated region
    $region18: #{tpu_custom_call.1} parent=1 // pred_check
      _
    $region19: #{tpu_custom_call.1} parent=1 // pred_check_branch
      %53 = sbr.rel (0) target = $region21
    $region20: #{tpu_custom_call.1} parent=1 // pred_region
      %54 = dma.done [#allocation4], 256
    $region21: #{tpu_custom_call.1} parent=1 // pred_fallthru
      _
    %55 = vsyncpa [#allocation3], 1
    %56 = vsyncpa [#allocation4], 1

</llo_original>
